<compile_context>
chip_gen: v5e
topology: v5e:2x2
jax: 0.10.0
libtpu: 0.0.40
codegen_flags: <defaults>
</compile_context>

<pallas_src>
import jax
import jax.numpy as jnp
from jax.experimental import pallas as pl
from jax.experimental.pallas import tpu as pltpu


def _se_kernel(x_ref, w1r_ref, b1r_ref, w2r_ref, b2r_ref,
               w1i_ref, b1i_ref, w2i_ref, b2i_ref, out_ref):
    # x_ref block: (Bblk, C, S2) with S2 = H*W*2; lane parity = real/imag.
    bblk, c, s2 = x_ref.shape
    s = s2 // 2

    lane = jax.lax.broadcasted_iota(jnp.int32, (bblk, c, s2), dimension=2)
    is_real = (lane & 1) == 0

    # AdaptiveAvgPool2d(1): two cross-lane reductions (real = even lanes).
    x = x_ref[...]
    sum_all = jnp.sum(x, axis=-1)                              # (Bblk, C)
    sum_r = jnp.sum(jnp.where(is_real, x, 0.0), axis=-1)       # (Bblk, C)
    inv_s = 1.0 / s
    pooled_r = sum_r * inv_s
    pooled_i = (sum_all - sum_r) * inv_s

    # Stack real/imag pooled vectors -> M = 2*Bblk for the FC matmuls.
    pooled = jnp.concatenate([pooled_r, pooled_i], axis=0)     # (2*Bblk, C)

    h_r = jnp.maximum(
        jnp.dot(pooled, w1r_ref[...], preferred_element_type=jnp.float32)
        + b1r_ref[...], 0.0)
    h_i = jnp.maximum(
        jnp.dot(pooled, w1i_ref[...], preferred_element_type=jnp.float32)
        + b1i_ref[...], 0.0)
    g_r = jax.nn.sigmoid(
        jnp.dot(h_r, w2r_ref[...], preferred_element_type=jnp.float32)
        + b2r_ref[...])                                        # (2*Bblk, C)
    g_i = jax.nn.sigmoid(
        jnp.dot(h_i, w2i_ref[...], preferred_element_type=jnp.float32)
        + b2i_ref[...])                                        # (2*Bblk, C)

    y_r = g_r[:bblk] - g_i[bblk:]          # fc_r(pool_r) - fc_i(pool_i)
    y_i = g_r[bblk:] + g_i[:bblk]          # fc_r(pool_i) + fc_i(pool_r)

    # Parity-interleaved lane broadcast of the per-channel scale; re-read the
    # ref for the store instead of holding x live across the FC chain.
    scale = jnp.where(is_real, y_r[:, :, None], y_i[:, :, None])
    out_ref[...] = x_ref[...] * scale


def se_layer(x, params):
    """x: (B, C, H, W, 2) float32.  params: (in, out)-layout weights."""
    B, C, H, W, two = x.shape
    assert two == 2
    S2 = H * W * 2
    hid = params["w1_r"].shape[1]

    # Free reshape (last three dims are contiguous) -- no HBM transpose pass.
    xk = x.reshape(B, C, S2)

    weights = (params["w1_r"], params["b1_r"], params["w2_r"], params["b2_r"],
               params["w1_i"], params["b1_i"], params["w2_i"], params["b2_i"])

    itemsize = 4
    per_sample = C * S2 * itemsize
    weight_bytes = sum(int(w.size) * itemsize for w in weights)

    # Pick Bblk: ~2 MiB blocks, keep >=2 grid steps when B >= 2 (v7x dual TC),
    # and stay within a v7x-safe VMEM budget for double-buffered in+out blocks.
    target_block = 2 << 20
    bblk = max(1, min(B, target_block // per_sample))
    if B >= 2:
        bblk = max(1, min(bblk, B // 2))
    budget = 40 << 20
    while bblk > 1 and 4 * bblk * per_sample + 2 * weight_bytes > budget:
        bblk -= 1
    while B % bblk != 0:
        bblk -= 1
    grid = (B // bblk,)
    block_bytes = bblk * per_sample

    x_spec = pl.BlockSpec((bblk, C, S2), lambda b: (b, 0, 0))
    out_spec = pl.BlockSpec((bblk, C, S2), lambda b: (b, 0, 0))

    def resident(arr):
        # Full-extent block + constant index_map -> DMA'd once, VMEM resident.
        n = arr.ndim
        return pl.BlockSpec(arr.shape, lambda b, _n=n: (0,) * _n)

    # VMEM need: in/out blocks double-buffered + resident weights + headroom.
    need = 4 * block_bytes + 2 * weight_bytes + (2 << 20)
    try:
        cap = int(pltpu.get_tpu_info().vmem_capacity_bytes)
    except Exception:
        cap = 64 << 20
    vmem_bytes = int(min(max(need, 16 << 20), max(int(cap * 0.75), 32 << 20)))

    # Advisory cost: purely HBM-bandwidth bound.
    cost = pl.CostEstimate(
        flops=int(6 * B * C * H * W + 8 * (2 * B) * C * hid),
        transcendentals=int(4 * B * C),
        bytes_accessed=int(2 * B * C * S2 * itemsize + weight_bytes),
    )

    out = pl.pallas_call(
        _se_kernel,
        out_shape=jax.ShapeDtypeStruct((B, C, S2), jnp.float32),
        grid_spec=pltpu.PrefetchScalarGridSpec(
            num_scalar_prefetch=0,
            grid=grid,
            in_specs=[x_spec] + [resident(w) for w in weights],
            out_specs=out_spec,
        ),
        compiler_params=pltpu.CompilerParams(
            dimension_semantics=("parallel",),
            vmem_limit_bytes=vmem_bytes,
        ),
        cost_estimate=cost,
    )(xk, *weights)

    # Free reshape back to the PyTorch layout.
    return out.reshape(B, C, H, W, 2)


def make_params(key, channel, reduction):
    hidden = channel // reduction
    ks = jax.random.split(key, 8)
    # Weights stored already transposed relative to torch.nn.Linear: (in, out).
    def w(k, shape):
        return jax.random.normal(k, shape, jnp.float32) * 0.1
    return {
        "w1_r": w(ks[0], (channel, hidden)), "b1_r": w(ks[1], (1, hidden)),
        "w2_r": w(ks[2], (hidden, channel)), "b2_r": w(ks[3], (1, channel)),
        "w1_i": w(ks[4], (channel, hidden)), "b1_i": w(ks[5], (1, hidden)),
        "w2_i": w(ks[6], (hidden, channel)), "b2_i": w(ks[7], (1, channel)),
    }


def se_layer_ref(x, p):
    """Pure-JAX reference matching the PyTorch forward."""
    xr = x[..., 0].mean(axis=(2, 3))
    xi = x[..., 1].mean(axis=(2, 3))

    def fc(z, w1, b1, w2, b2):
        h = jnp.maximum(z @ w1 + b1, 0.0)
        return jax.nn.sigmoid(h @ w2 + b2)

    fr_r = fc(xr, p["w1_r"], p["b1_r"], p["w2_r"], p["b2_r"])
    fr_i = fc(xi, p["w1_r"], p["b1_r"], p["w2_r"], p["b2_r"])
    fi_r = fc(xr, p["w1_i"], p["b1_i"], p["w2_i"], p["b2_i"])
    fi_i = fc(xi, p["w1_i"], p["b1_i"], p["w2_i"], p["b2_i"])
    y_r = (fr_r - fi_i)[:, :, None, None, None]
    y_i = (fr_i + fi_r)[:, :, None, None, None]
    y = jnp.concatenate([y_r, y_i], axis=4)
    return x * y


if __name__ == "__main__":
    B, C, H, W = 2, 64, 8, 8
    reduction = 16

    key = jax.random.PRNGKey(0)
    kx, kp = jax.random.split(key)
    x = jax.random.normal(kx, (B, C, H, W, 2), jnp.float32)
    params = make_params(kp, C, reduction)

    se_fn = jax.jit(se_layer)
    out = jax.block_until_ready(se_fn(x, params))
    ref = se_layer_ref(x, params)

    assert out.shape == (B, C, H, W, 2)
    assert jnp.allclose(out, ref, rtol=2e-5, atol=2e-5)
    print("KERNEL_OK")
</pallas_src>

<mosaic_0001>
module attributes {stable_mosaic.version = 11 : i64} {
  func.func @_se_kernel(%arg0: i32, %arg1: memref<1x64x128xf32, #tpu.memory_space<vmem>>, %arg2: memref<64x4xf32, #tpu.memory_space<vmem>>, %arg3: memref<1x4xf32, #tpu.memory_space<vmem>>, %arg4: memref<4x64xf32, #tpu.memory_space<vmem>>, %arg5: memref<1x64xf32, #tpu.memory_space<vmem>>, %arg6: memref<64x4xf32, #tpu.memory_space<vmem>>, %arg7: memref<1x4xf32, #tpu.memory_space<vmem>>, %arg8: memref<4x64xf32, #tpu.memory_space<vmem>>, %arg9: memref<1x64xf32, #tpu.memory_space<vmem>>, %arg10: memref<1x64x128xf32, #tpu.memory_space<vmem>>) attributes {dimension_semantics = [#tpu.dimension_semantics<parallel>], iteration_bounds = array<i64: 2>, scalar_prefetch = 0 : i64, scratch_operands = 0 : i64, tpu.core_type = #tpu.core_type<tc>, window_params = [{transform_indices = @transform_0, window_bounds = array<i64: 1, 64, 128>}, {pipeline_mode = #tpu.pipeline_mode<synchronous>, transform_indices = @transform_1, window_bounds = array<i64: 64, 4>}, {pipeline_mode = #tpu.pipeline_mode<synchronous>, transform_indices = @transform_2, window_bounds = array<i64: 1, 4>}, {pipeline_mode = #tpu.pipeline_mode<synchronous>, transform_indices = @transform_3, window_bounds = array<i64: 4, 64>}, {pipeline_mode = #tpu.pipeline_mode<synchronous>, transform_indices = @transform_4, window_bounds = array<i64: 1, 64>}, {pipeline_mode = #tpu.pipeline_mode<synchronous>, transform_indices = @transform_5, window_bounds = array<i64: 64, 4>}, {pipeline_mode = #tpu.pipeline_mode<synchronous>, transform_indices = @transform_6, window_bounds = array<i64: 1, 4>}, {pipeline_mode = #tpu.pipeline_mode<synchronous>, transform_indices = @transform_7, window_bounds = array<i64: 4, 64>}, {pipeline_mode = #tpu.pipeline_mode<synchronous>, transform_indices = @transform_8, window_bounds = array<i64: 1, 64>}, {transform_indices = @transform_9, window_bounds = array<i64: 1, 64, 128>}]} {
    %0 = tpu.iota {dimensions = array<i32: 2>} : vector<1x64x128xi32>
    %c1_i32 = arith.constant 1 : i32
    %1 = vector.broadcast %c1_i32 : i32 to vector<1x64x128xi32>
    %2 = arith.andi %0, %1 : vector<1x64x128xi32>
    %c0_i32 = arith.constant 0 : i32
    %3 = vector.broadcast %c0_i32 : i32 to vector<1x64x128xi32>
    %4 = arith.cmpi eq, %2, %3 : vector<1x64x128xi32>
    %c0 = arith.constant 0 : index
    %c0_0 = arith.constant 0 : index
    %c0_1 = arith.constant 0 : index
    %5 = vector.load %arg1[%c0, %c0_0, %c0_1] : memref<1x64x128xf32, #tpu.memory_space<vmem>>, vector<1x64x128xf32>
    %cst = arith.constant dense<0.000000e+00> : vector<1x64xf32>
    %6 = vector.multi_reduction <add>, %5, %cst [2] : vector<1x64x128xf32> to vector<1x64xf32>
    %cst_2 = arith.constant 0.000000e+00 : f32
    %7 = vector.broadcast %cst_2 : f32 to vector<1x64x128xf32>
    %8 = arith.select %4, %5, %7 : vector<1x64x128xi1>, vector<1x64x128xf32>
    %cst_3 = arith.constant dense<0.000000e+00> : vector<1x64xf32>
    %9 = vector.multi_reduction <add>, %8, %cst_3 [2] : vector<1x64x128xf32> to vector<1x64xf32>
    %cst_4 = arith.constant 1.562500e-02 : f32
    %10 = vector.broadcast %cst_4 : f32 to vector<1x64xf32>
    %11 = arith.mulf %9, %10 : vector<1x64xf32>
    %12 = arith.subf %6, %9 : vector<1x64xf32>
    %cst_5 = arith.constant 1.562500e-02 : f32
    %13 = vector.broadcast %cst_5 : f32 to vector<1x64xf32>
    %14 = arith.mulf %12, %13 : vector<1x64xf32>
    %15 = tpu.concatenate %11, %14 in 0 : vector<1x64xf32>, vector<1x64xf32> -> vector<2x64xf32>
    %c0_6 = arith.constant 0 : index
    %c0_7 = arith.constant 0 : index
    %16 = vector.load %arg2[%c0_6, %c0_7] : memref<64x4xf32, #tpu.memory_space<vmem>>, vector<64x4xf32>
    %cst_8 = arith.constant dense<0.000000e+00> : vector<2x4xf32>
    %17 = tpu.matmul %15, %16, %cst_8 {dimension_numbers = #tpu.dot_dimension_numbers<[1], [0], [0], [1], [0, 0, 1, 1], [], []>} : vector<2x64xf32>, vector<64x4xf32>, vector<2x4xf32> -> vector<2x4xf32>
    %c0_9 = arith.constant 0 : index
    %c0_10 = arith.constant 0 : index
    %18 = vector.load %arg3[%c0_9, %c0_10] : memref<1x4xf32, #tpu.memory_space<vmem>>, vector<1x4xf32>
    %19 = vector.broadcast %18 : vector<1x4xf32> to vector<2x4xf32>
    %20 = arith.addf %17, %19 : vector<2x4xf32>
    %cst_11 = arith.constant 0.000000e+00 : f32
    %21 = vector.broadcast %cst_11 : f32 to vector<2x4xf32>
    %22 = arith.maximumf %20, %21 : vector<2x4xf32>
    %c0_12 = arith.constant 0 : index
    %c0_13 = arith.constant 0 : index
    %23 = vector.load %arg6[%c0_12, %c0_13] : memref<64x4xf32, #tpu.memory_space<vmem>>, vector<64x4xf32>
    %cst_14 = arith.constant dense<0.000000e+00> : vector<2x4xf32>
    %24 = tpu.matmul %15, %23, %cst_14 {dimension_numbers = #tpu.dot_dimension_numbers<[1], [0], [0], [1], [0, 0, 1, 1], [], []>} : vector<2x64xf32>, vector<64x4xf32>, vector<2x4xf32> -> vector<2x4xf32>
    %c0_15 = arith.constant 0 : index
    %c0_16 = arith.constant 0 : index
    %25 = vector.load %arg7[%c0_15, %c0_16] : memref<1x4xf32, #tpu.memory_space<vmem>>, vector<1x4xf32>
    %26 = vector.broadcast %25 : vector<1x4xf32> to vector<2x4xf32>
    %27 = arith.addf %24, %26 : vector<2x4xf32>
    %cst_17 = arith.constant 0.000000e+00 : f32
    %28 = vector.broadcast %cst_17 : f32 to vector<2x4xf32>
    %29 = arith.maximumf %27, %28 : vector<2x4xf32>
    %c0_18 = arith.constant 0 : index
    %c0_19 = arith.constant 0 : index
    %30 = vector.load %arg4[%c0_18, %c0_19] : memref<4x64xf32, #tpu.memory_space<vmem>>, vector<4x64xf32>
    %cst_20 = arith.constant dense<0.000000e+00> : vector<2x64xf32>
    %31 = tpu.matmul %22, %30, %cst_20 {dimension_numbers = #tpu.dot_dimension_numbers<[1], [0], [0], [1], [0, 0, 1, 1], [], []>} : vector<2x4xf32>, vector<4x64xf32>, vector<2x64xf32> -> vector<2x64xf32>
    %c0_21 = arith.constant 0 : index
    %c0_22 = arith.constant 0 : index
    %32 = vector.load %arg5[%c0_21, %c0_22] : memref<1x64xf32, #tpu.memory_space<vmem>>, vector<1x64xf32>
    %33 = vector.broadcast %32 : vector<1x64xf32> to vector<2x64xf32>
    %34 = arith.addf %31, %33 : vector<2x64xf32>
    %35 = arith.negf %34 : vector<2x64xf32>
    %36 = math.exp %35 : vector<2x64xf32>
    %cst_23 = arith.constant 1.000000e+00 : f32
    %37 = vector.broadcast %cst_23 : f32 to vector<2x64xf32>
    %38 = arith.addf %37, %36 : vector<2x64xf32>
    %39 = arith.divf %37, %38 : vector<2x64xf32>
    %c0_24 = arith.constant 0 : index
    %c0_25 = arith.constant 0 : index
    %40 = vector.load %arg8[%c0_24, %c0_25] : memref<4x64xf32, #tpu.memory_space<vmem>>, vector<4x64xf32>
    %cst_26 = arith.constant dense<0.000000e+00> : vector<2x64xf32>
    %41 = tpu.matmul %29, %40, %cst_26 {dimension_numbers = #tpu.dot_dimension_numbers<[1], [0], [0], [1], [0, 0, 1, 1], [], []>} : vector<2x4xf32>, vector<4x64xf32>, vector<2x64xf32> -> vector<2x64xf32>
    %c0_27 = arith.constant 0 : index
    %c0_28 = arith.constant 0 : index
    %42 = vector.load %arg9[%c0_27, %c0_28] : memref<1x64xf32, #tpu.memory_space<vmem>>, vector<1x64xf32>
    %43 = vector.broadcast %42 : vector<1x64xf32> to vector<2x64xf32>
    %44 = arith.addf %41, %43 : vector<2x64xf32>
    %45 = arith.negf %44 : vector<2x64xf32>
    %46 = math.exp %45 : vector<2x64xf32>
    %cst_29 = arith.constant 1.000000e+00 : f32
    %47 = vector.broadcast %cst_29 : f32 to vector<2x64xf32>
    %48 = arith.addf %47, %46 : vector<2x64xf32>
    %49 = arith.divf %47, %48 : vector<2x64xf32>
    %50 = vector.extract_strided_slice %39 {offsets = [0, 0], sizes = [1, 64], strides = [1, 1]} : vector<2x64xf32> to vector<1x64xf32>
    %51 = vector.extract_strided_slice %49 {offsets = [1, 0], sizes = [1, 64], strides = [1, 1]} : vector<2x64xf32> to vector<1x64xf32>
    %52 = arith.subf %50, %51 : vector<1x64xf32>
    %53 = vector.extract_strided_slice %39 {offsets = [1, 0], sizes = [1, 64], strides = [1, 1]} : vector<2x64xf32> to vector<1x64xf32>
    %54 = vector.extract_strided_slice %49 {offsets = [0, 0], sizes = [1, 64], strides = [1, 1]} : vector<2x64xf32> to vector<1x64xf32>
    %55 = arith.addf %53, %54 : vector<1x64xf32>
    %56 = vector.shape_cast %52 : vector<1x64xf32> to vector<1x64x1xf32>
    %57 = vector.shape_cast %55 : vector<1x64xf32> to vector<1x64x1xf32>
    %58 = vector.shape_cast %56 : vector<1x64x1xf32> to vector<1x64x1xf32>
    %59 = vector.broadcast %58 : vector<1x64x1xf32> to vector<1x64x128xf32>
    %60 = vector.shape_cast %57 : vector<1x64x1xf32> to vector<1x64x1xf32>
    %61 = vector.broadcast %60 : vector<1x64x1xf32> to vector<1x64x128xf32>
    %62 = arith.select %4, %59, %61 : vector<1x64x128xi1>, vector<1x64x128xf32>
    %c0_30 = arith.constant 0 : index
    %c0_31 = arith.constant 0 : index
    %c0_32 = arith.constant 0 : index
    %63 = vector.load %arg1[%c0_30, %c0_31, %c0_32] : memref<1x64x128xf32, #tpu.memory_space<vmem>>, vector<1x64x128xf32>
    %64 = arith.mulf %63, %62 : vector<1x64x128xf32>
    %c0_33 = arith.constant 0 : index
    %c0_34 = arith.constant 0 : index
    %c0_35 = arith.constant 0 : index
    %65 = vector.load %arg10[%c0_33, %c0_34, %c0_35] : memref<1x64x128xf32, #tpu.memory_space<vmem>>, vector<1x64x128xf32>
    tpu.vector_store %arg10[%c0_33, %c0_34, %c0_35], %64 {strides = array<i32>} : memref<1x64x128xf32, #tpu.memory_space<vmem>>, vector<1x64x128xf32>,
    return
  }
  func.func @transform_0(%arg0: i32) -> (i32, i32, i32) {
    %c0_i32 = arith.constant 0 : i32
    %c0_i32_0 = arith.constant 0 : i32
    %c0_i32_1 = arith.constant 0 : i32
    return %arg0, %c0_i32, %c0_i32_0 : i32, i32, i32
  }
  func.func @transform_1(%arg0: i32) -> (i32, i32) {
    %c0_i32 = arith.constant 0 : i32
    %c0_i32_0 = arith.constant 0 : i32
    %c0_i32_1 = arith.constant 0 : i32
    return %c0_i32, %c0_i32_0 : i32, i32
  }
  func.func @transform_2(%arg0: i32) -> (i32, i32) {
    %c0_i32 = arith.constant 0 : i32
    %c0_i32_0 = arith.constant 0 : i32
    %c0_i32_1 = arith.constant 0 : i32
    return %c0_i32, %c0_i32_0 : i32, i32
  }
  func.func @transform_3(%arg0: i32) -> (i32, i32) {
    %c0_i32 = arith.constant 0 : i32
    %c0_i32_0 = arith.constant 0 : i32
    %c0_i32_1 = arith.constant 0 : i32
    return %c0_i32, %c0_i32_0 : i32, i32
  }
  func.func @transform_4(%arg0: i32) -> (i32, i32) {
    %c0_i32 = arith.constant 0 : i32
    %c0_i32_0 = arith.constant 0 : i32
    %c0_i32_1 = arith.constant 0 : i32
    return %c0_i32, %c0_i32_0 : i32, i32
  }
  func.func @transform_5(%arg0: i32) -> (i32, i32) {
    %c0_i32 = arith.constant 0 : i32
    %c0_i32_0 = arith.constant 0 : i32
    %c0_i32_1 = arith.constant 0 : i32
    return %c0_i32, %c0_i32_0 : i32, i32
  }
  func.func @transform_6(%arg0: i32) -> (i32, i32) {
    %c0_i32 = arith.constant 0 : i32
    %c0_i32_0 = arith.constant 0 : i32
    %c0_i32_1 = arith.constant 0 : i32
    return %c0_i32, %c0_i32_0 : i32, i32
  }
  func.func @transform_7(%arg0: i32) -> (i32, i32) {
    %c0_i32 = arith.constant 0 : i32
    %c0_i32_0 = arith.constant 0 : i32
    %c0_i32_1 = arith.constant 0 : i32
    return %c0_i32, %c0_i32_0 : i32, i32
  }
  func.func @transform_8(%arg0: i32) -> (i32, i32) {
    %c0_i32 = arith.constant 0 : i32
    %c0_i32_0 = arith.constant 0 : i32
    %c0_i32_1 = arith.constant 0 : i32
    return %c0_i32, %c0_i32_0 : i32, i32
  }
  func.func @transform_9(%arg0: i32) -> (i32, i32, i32) {
    %c0_i32 = arith.constant 0 : i32
    %c0_i32_0 = arith.constant 0 : i32
    %c0_i32_1 = arith.constant 0 : i32
    return %arg0, %c0_i32, %c0_i32_0 : i32, i32, i32
  }
}

</mosaic_0001>

<llo_original>
// kernel: se_layer.1
$region0: #{se_layer.1}
  #allocation0 [shape = 'u32[]', space=smem, size = 0x4, offset = 0x4, fixed_abs, tag = 'smem constant byte address 0x4 - core index']
  #allocation1 [shape = 'u32[72,128]{1,0:T(1,128)}', space=vmem, size = 0x9000, scoped, tag = 'internal scratch']
  %s0 = inlined_call_operand.vmem [shape: f32[2,64,128], index: 0, kind: input, shape index: {}]
  %s1 = inlined_call_operand.vmem [shape: f32[64,4], index: 1, kind: input, shape index: {}]
  %s2 = inlined_call_operand.vmem [shape: f32[1,4], index: 2, kind: input, shape index: {}]
  %s3 = inlined_call_operand.vmem [shape: f32[4,64], index: 3, kind: input, shape index: {}]
  %s4 = inlined_call_operand.vmem [shape: f32[1,64], index: 4, kind: input, shape index: {}]
  %s5 = inlined_call_operand.vmem [shape: f32[64,4], index: 5, kind: input, shape index: {}]
  %s6 = inlined_call_operand.vmem [shape: f32[1,4], index: 6, kind: input, shape index: {}]
  %s7 = inlined_call_operand.vmem [shape: f32[4,64], index: 7, kind: input, shape index: {}]
  %s8 = inlined_call_operand.vmem [shape: f32[1,64], index: 8, kind: input, shape index: {}]
  %s9 = inlined_call_operand.vmem [shape: f32[2,64,128], index: 9, kind: output, shape index: {}]
  %s10 = sld [smem:[#allocation0]]
  $region69: #{se_layer.1} parent=0
    _
  %s12 = ssub.s32 1, %s10
  %s13 = scalar_select 0, %s12, %s10
  loop: start=0, step=1, limit=4
  $region2: #{se_layer.1} parent=0 // loop_pre_header
    _
  $region3: #{se_layer.1} parent=0 // loop_header
    %s15 = sphi 0, %s19
    %p16 = scmp.ge.s32.totalorder %s15, 4
    %s25 = sphi 0, %s27
    %s28 = sphi 0, %s25
    %s29 = sphi 0, %s28
    %s45 = sphi 0, %s29
    %s49 = sphi 0, %s49
    %s51 = sphi 0, %s49
    %s52 = sphi 0, %s51
    %s66 = sphi 0, %s52
    %s70 = sphi 0, %s70
    %s72 = sphi 0, %s70
    %s73 = sphi 0, %s72
    %s87 = sphi 0, %s73
    %s91 = sphi 0, %s91
    %s93 = sphi 0, %s91
    %s94 = sphi 0, %s93
    %s108 = sphi 0, %s94
    %s112 = sphi 0, %s112
    %s114 = sphi 0, %s112
    %s115 = sphi 0, %s114
    %s129 = sphi 0, %s115
    %s133 = sphi 0, %s133
    %s135 = sphi 0, %s133
    %s136 = sphi 0, %s135
    %s150 = sphi 0, %s136
    %s154 = sphi 0, %s154
    %s156 = sphi 0, %s154
    %s157 = sphi 0, %s156
    %s171 = sphi 0, %s157
    %s175 = sphi 0, %s175
    %s177 = sphi 0, %s175
    %s178 = sphi 0, %s177
    %s192 = sphi 0, %s178
    %s196 = sphi 0, %s196
    %s198 = sphi 0, %s196
    %s199 = sphi 0, %s198
    %s213 = sphi 0, %s199
    %s219 = sphi 0, %s221
    %s222 = sphi 0, %s219
    %s223 = sphi 0, %s222
    %s239 = sphi 0, %s223
  $region4: #{se_layer.1} parent=0 // loop_header_branch
    %18 = sbr.rel (%p16) target = $region8
  $region5: #{se_layer.1} parent=0 // loop_body
    %s20 = ssub.s32 %s15, 1
    %s21 = ssub.s32 %s15, 2
    %s22 = sadd.s32 %s15, 1
    %s23 = ssub.s32 %s15, %s22
    %p24 = scmp.eq.s32.totalorder %s23, 0
    %s26 = sadd.s32 %s25, 1
    %s27 = scalar_select %p24, %s25, %s26
    %p30 = pneg %p24
    %p31 = scmp.eq.s32.totalorder %s15, 1
    %p32 = por %p30, %p31
    %p33 = scmp.ne.s32.totalorder %s25, %s28
    %p34 = scmp.eq.s32.totalorder %s15, 0
    %p35 = por %p33, %p34
    %p36 = scmp.ne.s32.totalorder %s25, %s28
    %p37 = scmp.eq.s32.totalorder %s20, 1
    %p38 = por %p36, %p37
    %p39 = scmp.ne.s32.totalorder %s28, %s29
    %p40 = scmp.eq.s32.totalorder %s20, 0
    %p41 = por %p39, %p40
    %p42 = scmp.ne.s32.totalorder %s28, %s29
    %p43 = scmp.eq.s32.totalorder %s21, 1
    %p44 = por %p42, %p43
    %p46 = scmp.ne.s32.totalorder %s29, %s45
    %p47 = scmp.eq.s32.totalorder %s21, 0
    %p48 = por %p46, %p47
    %s50 = sadd.s32 %s49, 1
    %p53 = scmp.eq.s32.totalorder %s15, 1
    %p54 = scmp.ne.s32.totalorder %s49, %s51
    %p55 = scmp.eq.s32.totalorder %s15, 0
    %p56 = por %p54, %p55
    %p57 = scmp.ne.s32.totalorder %s49, %s51
    %p58 = scmp.eq.s32.totalorder %s20, 1
    %p59 = por %p57, %p58
    %p60 = scmp.ne.s32.totalorder %s51, %s52
    %p61 = scmp.eq.s32.totalorder %s20, 0
    %p62 = por %p60, %p61
    %p63 = scmp.ne.s32.totalorder %s51, %s52
    %p64 = scmp.eq.s32.totalorder %s21, 1
    %p65 = por %p63, %p64
    %p67 = scmp.ne.s32.totalorder %s52, %s66
    %p68 = scmp.eq.s32.totalorder %s21, 0
    %p69 = por %p67, %p68
    %s71 = sadd.s32 %s70, 1
    %p74 = scmp.eq.s32.totalorder %s15, 1
    %p75 = scmp.ne.s32.totalorder %s70, %s72
    %p76 = scmp.eq.s32.totalorder %s15, 0
    %p77 = por %p75, %p76
    %p78 = scmp.ne.s32.totalorder %s70, %s72
    %p79 = scmp.eq.s32.totalorder %s20, 1
    %p80 = por %p78, %p79
    %p81 = scmp.ne.s32.totalorder %s72, %s73
    %p82 = scmp.eq.s32.totalorder %s20, 0
    %p83 = por %p81, %p82
    %p84 = scmp.ne.s32.totalorder %s72, %s73
    %p85 = scmp.eq.s32.totalorder %s21, 1
    %p86 = por %p84, %p85
    %p88 = scmp.ne.s32.totalorder %s73, %s87
    %p89 = scmp.eq.s32.totalorder %s21, 0
    %p90 = por %p88, %p89
    %s92 = sadd.s32 %s91, 1
    %p95 = scmp.eq.s32.totalorder %s15, 1
    %p96 = scmp.ne.s32.totalorder %s91, %s93
    %p97 = scmp.eq.s32.totalorder %s15, 0
    %p98 = por %p96, %p97
    %p99 = scmp.ne.s32.totalorder %s91, %s93
    %p100 = scmp.eq.s32.totalorder %s20, 1
    %p101 = por %p99, %p100
    %p102 = scmp.ne.s32.totalorder %s93, %s94
    %p103 = scmp.eq.s32.totalorder %s20, 0
    %p104 = por %p102, %p103
    %p105 = scmp.ne.s32.totalorder %s93, %s94
    %p106 = scmp.eq.s32.totalorder %s21, 1
    %p107 = por %p105, %p106
    %p109 = scmp.ne.s32.totalorder %s94, %s108
    %p110 = scmp.eq.s32.totalorder %s21, 0
    %p111 = por %p109, %p110
    %s113 = sadd.s32 %s112, 1
    %p116 = scmp.eq.s32.totalorder %s15, 1
    %p117 = scmp.ne.s32.totalorder %s112, %s114
    %p118 = scmp.eq.s32.totalorder %s15, 0
    %p119 = por %p117, %p118
    %p120 = scmp.ne.s32.totalorder %s112, %s114
    %p121 = scmp.eq.s32.totalorder %s20, 1
    %p122 = por %p120, %p121
    %p123 = scmp.ne.s32.totalorder %s114, %s115
    %p124 = scmp.eq.s32.totalorder %s20, 0
    %p125 = por %p123, %p124
    %p126 = scmp.ne.s32.totalorder %s114, %s115
    %p127 = scmp.eq.s32.totalorder %s21, 1
    %p128 = por %p126, %p127
    %p130 = scmp.ne.s32.totalorder %s115, %s129
    %p131 = scmp.eq.s32.totalorder %s21, 0
    %p132 = por %p130, %p131
    %s134 = sadd.s32 %s133, 1
    %p137 = scmp.eq.s32.totalorder %s15, 1
    %p138 = scmp.ne.s32.totalorder %s133, %s135
    %p139 = scmp.eq.s32.totalorder %s15, 0
    %p140 = por %p138, %p139
    %p141 = scmp.ne.s32.totalorder %s133, %s135
    %p142 = scmp.eq.s32.totalorder %s20, 1
    %p143 = por %p141, %p142
    %p144 = scmp.ne.s32.totalorder %s135, %s136
    %p145 = scmp.eq.s32.totalorder %s20, 0
    %p146 = por %p144, %p145
    %p147 = scmp.ne.s32.totalorder %s135, %s136
    %p148 = scmp.eq.s32.totalorder %s21, 1
    %p149 = por %p147, %p148
    %p151 = scmp.ne.s32.totalorder %s136, %s150
    %p152 = scmp.eq.s32.totalorder %s21, 0
    %p153 = por %p151, %p152
    %s155 = sadd.s32 %s154, 1
    %p158 = scmp.eq.s32.totalorder %s15, 1
    %p159 = scmp.ne.s32.totalorder %s154, %s156
    %p160 = scmp.eq.s32.totalorder %s15, 0
    %p161 = por %p159, %p160
    %p162 = scmp.ne.s32.totalorder %s154, %s156
    %p163 = scmp.eq.s32.totalorder %s20, 1
    %p164 = por %p162, %p163
    %p165 = scmp.ne.s32.totalorder %s156, %s157
    %p166 = scmp.eq.s32.totalorder %s20, 0
    %p167 = por %p165, %p166
    %p168 = scmp.ne.s32.totalorder %s156, %s157
    %p169 = scmp.eq.s32.totalorder %s21, 1
    %p170 = por %p168, %p169
    %p172 = scmp.ne.s32.totalorder %s157, %s171
    %p173 = scmp.eq.s32.totalorder %s21, 0
    %p174 = por %p172, %p173
    %s176 = sadd.s32 %s175, 1
    %p179 = scmp.eq.s32.totalorder %s15, 1
    %p180 = scmp.ne.s32.totalorder %s175, %s177
    %p181 = scmp.eq.s32.totalorder %s15, 0
    %p182 = por %p180, %p181
    %p183 = scmp.ne.s32.totalorder %s175, %s177
    %p184 = scmp.eq.s32.totalorder %s20, 1
    %p185 = por %p183, %p184
    %p186 = scmp.ne.s32.totalorder %s177, %s178
    %p187 = scmp.eq.s32.totalorder %s20, 0
    %p188 = por %p186, %p187
    %p189 = scmp.ne.s32.totalorder %s177, %s178
    %p190 = scmp.eq.s32.totalorder %s21, 1
    %p191 = por %p189, %p190
    %p193 = scmp.ne.s32.totalorder %s178, %s192
    %p194 = scmp.eq.s32.totalorder %s21, 0
    %p195 = por %p193, %p194
    %s197 = sadd.s32 %s196, 1
    %p200 = scmp.eq.s32.totalorder %s15, 1
    %p201 = scmp.ne.s32.totalorder %s196, %s198
    %p202 = scmp.eq.s32.totalorder %s15, 0
    %p203 = por %p201, %p202
    %p204 = scmp.ne.s32.totalorder %s196, %s198
    %p205 = scmp.eq.s32.totalorder %s20, 1
    %p206 = por %p204, %p205
    %p207 = scmp.ne.s32.totalorder %s198, %s199
    %p208 = scmp.eq.s32.totalorder %s20, 0
    %p209 = por %p207, %p208
    %p210 = scmp.ne.s32.totalorder %s198, %s199
    %p211 = scmp.eq.s32.totalorder %s21, 1
    %p212 = por %p210, %p211
    %p214 = scmp.ne.s32.totalorder %s199, %s213
    %p215 = scmp.eq.s32.totalorder %s21, 0
    %p216 = por %p214, %p215
    %s217 = ssub.s32 %s15, %s22
    %p218 = scmp.eq.s32.totalorder %s217, 0
    %s220 = sadd.s32 %s219, 1
    %s221 = scalar_select %p218, %s219, %s220
    %p224 = pneg %p218
    %p225 = scmp.eq.s32.totalorder %s15, 1
    %p226 = por %p224, %p225
    %p227 = scmp.ne.s32.totalorder %s219, %s222
    %p228 = scmp.eq.s32.totalorder %s15, 0
    %p229 = por %p227, %p228
    %p230 = scmp.ne.s32.totalorder %s219, %s222
    %p231 = scmp.eq.s32.totalorder %s20, 1
    %p232 = por %p230, %p231
    %p233 = scmp.ne.s32.totalorder %s222, %s223
    %p234 = scmp.eq.s32.totalorder %s20, 0
    %p235 = por %p233, %p234
    %p236 = scmp.ne.s32.totalorder %s222, %s223
    %p237 = scmp.eq.s32.totalorder %s21, 1
    %p238 = por %p236, %p237
    %p240 = scmp.ne.s32.totalorder %s223, %s239
    %p241 = scmp.eq.s32.totalorder %s21, 0
    %p242 = por %p240, %p241
    %p243 = scmp.le.s32.totalorder 1, %s15
    %p244 = scmp.lt.s32.totalorder %s15, 3
    %p245 = pnand %p243, %p244
    %p246 = pneg %p245
    // Predicated region
    $region9: #{se_layer.1} parent=5 // pred_check
      _
    $region10: #{se_layer.1} parent=5 // pred_check_branch
      %248 = sbr.rel (%p245) target = $region12
    $region11: #{se_layer.1} parent=5 // pred_region
      %s249 = ssub.s32 %s15, 1
      // Predicated region
      $region13: #{se_layer.1} parent=11 // pred_check
        %p250 = pneg %p62
      $region14: #{se_layer.1} parent=11 // pred_check_branch
        %252 = sbr.rel (%p250) target = $region16
      $region15: #{se_layer.1} parent=11 // pred_region
        _
      $region16: #{se_layer.1} parent=11 // pred_fallthru
        _
      // Predicated region
      $region17: #{se_layer.1} parent=11 // pred_check
        %p253 = pneg %p83
      $region18: #{se_layer.1} parent=11 // pred_check_branch
        %255 = sbr.rel (%p253) target = $region20
      $region19: #{se_layer.1} parent=11 // pred_region
        _
      $region20: #{se_layer.1} parent=11 // pred_fallthru
        _
      // Predicated region
      $region21: #{se_layer.1} parent=11 // pred_check
        %p256 = pneg %p104
      $region22: #{se_layer.1} parent=11 // pred_check_branch
        %258 = sbr.rel (%p256) target = $region24
      $region23: #{se_layer.1} parent=11 // pred_region
        _
      $region24: #{se_layer.1} parent=11 // pred_fallthru
        _
      // Predicated region
      $region25: #{se_layer.1} parent=11 // pred_check
        %p259 = pneg %p125
      $region26: #{se_layer.1} parent=11 // pred_check_branch
        %261 = sbr.rel (%p259) target = $region28
      $region27: #{se_layer.1} parent=11 // pred_region
        _
      $region28: #{se_layer.1} parent=11 // pred_fallthru
        _
      // Predicated region
      $region29: #{se_layer.1} parent=11 // pred_check
        %p262 = pneg %p146
      $region30: #{se_layer.1} parent=11 // pred_check_branch
        %264 = sbr.rel (%p262) target = $region32
      $region31: #{se_layer.1} parent=11 // pred_region
        _
      $region32: #{se_layer.1} parent=11 // pred_fallthru
        _
      // Predicated region
      $region33: #{se_layer.1} parent=11 // pred_check
        %p265 = pneg %p167
      $region34: #{se_layer.1} parent=11 // pred_check_branch
        %267 = sbr.rel (%p265) target = $region36
      $region35: #{se_layer.1} parent=11 // pred_region
        _
      $region36: #{se_layer.1} parent=11 // pred_fallthru
        _
      // Predicated region
      $region37: #{se_layer.1} parent=11 // pred_check
        %p268 = pneg %p188
      $region38: #{se_layer.1} parent=11 // pred_check_branch
        %270 = sbr.rel (%p268) target = $region40
      $region39: #{se_layer.1} parent=11 // pred_region
        _
      $region40: #{se_layer.1} parent=11 // pred_fallthru
        _
      // Predicated region
      $region41: #{se_layer.1} parent=11 // pred_check
        %p271 = pneg %p209
      $region42: #{se_layer.1} parent=11 // pred_check_branch
        %273 = sbr.rel (%p271) target = $region44
      $region43: #{se_layer.1} parent=11 // pred_region
        _
      $region44: #{se_layer.1} parent=11 // pred_fallthru
        _
    $region12: #{se_layer.1} parent=5 // pred_fallthru
      _
    %p274 = scmp.lt.s32.totalorder %s15, 2
    // Predicated region
    $region45: #{se_layer.1} parent=5 // pred_check
      %p275 = pneg %p274
    $region46: #{se_layer.1} parent=5 // pred_check_branch
      %277 = sbr.rel (%p275) target = $region48
    $region47: #{se_layer.1} parent=5 // pred_region
      // Predicated region
      $region49: #{se_layer.1} parent=47 // pred_check
        %p278 = pneg %p35
      $region50: #{se_layer.1} parent=47 // pred_check_branch
        %280 = sbr.rel (%p278) target = $region52
      $region51: #{se_layer.1} parent=47 // pred_region
        %p281 = scmp.lt.s32.totalorder %s15, 1
        %s282 = scalar_select %p281, %s15, 1
        %s283 = smul.addr %s282, 8
        %s284 = smul.addr %s283, 8
        %s285 = scalar_lea.vmem %s0, %s284
      $region52: #{se_layer.1} parent=47 // pred_fallthru
        _
    $region48: #{se_layer.1} parent=5 // pred_fallthru
      _
    %p286 = scmp.le.s32.totalorder 1, %s15
    %p287 = scmp.lt.s32.totalorder %s15, 3
    %p288 = pnand %p286, %p287
    %p289 = pneg %p288
    // Predicated region
    $region53: #{se_layer.1} parent=5 // pred_check
      _
    $region54: #{se_layer.1} parent=5 // pred_check_branch
      %291 = sbr.rel (%p288) target = $region56
    $region55: #{se_layer.1} parent=5 // pred_region
      %s292 = ssub.s32 %s15, 1
      %p293 = scmp.lt.s32.totalorder %s20, 1
      %s294 = scalar_select %p293, %s20, 1
      %s295 = smul.addr %s294, 8
      %s296 = smul.addr %s295, 8
      %s297 = scalar_lea.vmem %s0, %s296
      %p298 = pneg %p41
      %p299 = pneg %p38
      %p300 = pneg %p62
      %p301 = pneg %p59
      %p302 = pneg %p83
      %p303 = pneg %p80
      %p304 = pneg %p104
      %p305 = pneg %p101
      %p306 = pneg %p125
      %p307 = pneg %p122
      %p308 = pneg %p146
      %p309 = pneg %p143
      %p310 = pneg %p167
      %p311 = pneg %p164
      %p312 = pneg %p188
      %p313 = pneg %p185
      %p314 = pneg %p209
      %p315 = pneg %p206
      %p316 = pneg %p235
      %p317 = pneg %p232
      %p318 = scmp.lt.s32.totalorder %s20, 1
      %s319 = scalar_select %p318, %s20, 1
      %s320 = smul.addr %s319, 8
      %s321 = smul.addr %s320, 8
      %s322 = scalar_lea.vmem %s9, %s321
      %p323 = scmp.lt.s32.totalorder %s20, 1
      %s324 = scalar_select %p323, %s20, 1
      %s325 = smul.addr %s324, 8
      %s326 = smul.addr %s325, 8
      %s327 = scalar_lea.vmem %s0, %s326
      %p328 = scmp.lt.s32.totalorder %s20, 1
      %s329 = scalar_select %p328, %s20, 1
      %s330 = smul.addr %s329, 8
      %s331 = smul.addr %s330, 8
      %s332 = scalar_lea.vmem %s9, %s331
      %v333 = vlaneseq
      %v334 = vand.u32 %v333, 127
      %v335 = vand.u32 %v334, 1
      %vm336 = vcmp.eq.s32.totalorder %v335, 0
      %v337 = vld [vmem:[%s327] sm:$0xff]
      %v338 = vld [vmem:[%s327 + $0x8] sm:$0xff]
      %v339 = vld [vmem:[%s327 + $0x10] sm:$0xff]
      %v340 = vld [vmem:[%s327 + $0x18] sm:$0xff]
      %v341 = vld [vmem:[%s327 + $0x20] sm:$0xff]
      %v342 = vld [vmem:[%s327 + $0x28] sm:$0xff]
      %v343 = vld [vmem:[%s327 + $0x30] sm:$0xff]
      %v344 = vld [vmem:[%s327 + $0x38] sm:$0xff]
      %345 = vadd.xlane.f32.xlu0 %v337
      %v346 = vpop.xlane.xlu0 %345
      %347 = vadd.xlane.f32.xlu0 %v338
      %v348 = vpop.xlane.xlu0 %347
      %349 = vadd.xlane.f32.xlu0 %v339
      %v350 = vpop.xlane.xlu0 %349
      %351 = vadd.xlane.f32.xlu0 %v340
      %v352 = vpop.xlane.xlu0 %351
      %353 = vadd.xlane.f32.xlu0 %v341
      %v354 = vpop.xlane.xlu0 %353
      %355 = vadd.xlane.f32.xlu0 %v342
      %v356 = vpop.xlane.xlu0 %355
      %357 = vadd.xlane.f32.xlu0 %v343
      %v358 = vpop.xlane.xlu0 %357
      %359 = vadd.xlane.f32.xlu0 %v344
      %v360 = vpop.xlane.xlu0 %359
      %v361 = vsel %vm336, %v337, 0.0
      %v362 = vsel %vm336, %v338, 0.0
      %v363 = vsel %vm336, %v339, 0.0
      %v364 = vsel %vm336, %v340, 0.0
      %v365 = vsel %vm336, %v341, 0.0
      %v366 = vsel %vm336, %v342, 0.0
      %v367 = vsel %vm336, %v343, 0.0
      %v368 = vsel %vm336, %v344, 0.0
      %369 = vadd.xlane.f32.xlu0 %v361
      %v370 = vpop.xlane.xlu0 %369
      %371 = vadd.xlane.f32.xlu0 %v362
      %v372 = vpop.xlane.xlu0 %371
      %373 = vadd.xlane.f32.xlu0 %v363
      %v374 = vpop.xlane.xlu0 %373
      %375 = vadd.xlane.f32.xlu0 %v364
      %v376 = vpop.xlane.xlu0 %375
      %377 = vadd.xlane.f32.xlu0 %v365
      %v378 = vpop.xlane.xlu0 %377
      %379 = vadd.xlane.f32.xlu0 %v366
      %v380 = vpop.xlane.xlu0 %379
      %381 = vadd.xlane.f32.xlu0 %v367
      %v382 = vpop.xlane.xlu0 %381
      %383 = vadd.xlane.f32.xlu0 %v368
      %v384 = vpop.xlane.xlu0 %383
      %v385 = vmul.f32 %v370, 0.015625
      %v386 = vmul.f32 %v372, 0.015625
      %v387 = vmul.f32 %v374, 0.015625
      %v388 = vmul.f32 %v376, 0.015625
      %v389 = vmul.f32 %v378, 0.015625
      %v390 = vmul.f32 %v380, 0.015625
      %v391 = vmul.f32 %v382, 0.015625
      %v392 = vmul.f32 %v384, 0.015625
      %v393 = vsub.f32 %v346, %v370
      %v394 = vsub.f32 %v348, %v372
      %v395 = vsub.f32 %v350, %v374
      %v396 = vsub.f32 %v352, %v376
      %v397 = vsub.f32 %v354, %v378
      %v398 = vsub.f32 %v356, %v380
      %v399 = vsub.f32 %v358, %v382
      %v400 = vsub.f32 %v360, %v384
      %v401 = vmul.f32 %v393, 0.015625
      %v402 = vmul.f32 %v394, 0.015625
      %v403 = vmul.f32 %v395, 0.015625
      %v404 = vmul.f32 %v396, 0.015625
      %v405 = vmul.f32 %v397, 0.015625
      %v406 = vmul.f32 %v398, 0.015625
      %v407 = vmul.f32 %v399, 0.015625
      %v408 = vmul.f32 %v400, 0.015625
      %v417 = vperm.slane %v385, %v334
      %v418 = vadd.s32 %v334, 4294967288
      %v419 = vperm.slane %v386, %v418
      %vm420 = vcmask 130112
      %v421 = vsel %vm420, %v419, %v417
      %v422 = vadd.s32 %v334, 4294967280
      %v423 = vperm.slane %v387, %v422
      %vm424 = vcmask 195712
      %v425 = vsel %vm424, %v423, %v421
      %v426 = vadd.s32 %v334, 4294967272
      %v427 = vperm.slane %v388, %v426
      %vm428 = vcmask 261312
      %v429 = vsel %vm428, %v427, %v425
      %v430 = vadd.s32 %v334, 4294967264
      %v431 = vperm.slane %v389, %v430
      %vm432 = vcmask 326912
      %v433 = vsel %vm432, %v431, %v429
      %v434 = vadd.s32 %v334, 4294967256
      %v435 = vperm.slane %v390, %v434
      %vm436 = vcmask 392512
      %v437 = vsel %vm436, %v435, %v433
      %v438 = vadd.s32 %v334, 4294967248
      %v439 = vperm.slane %v391, %v438
      %vm440 = vcmask 458112
      %v441 = vsel %vm440, %v439, %v437
      %v442 = vadd.s32 %v334, 4294967240
      %v443 = vperm.slane %v392, %v442
      %vm444 = vcmask 523712
      %v445 = vsel %vm444, %v443, %v441
      %v455 = vperm.slane %v401, %v334
      %v456 = vperm.slane %v402, %v418
      %v457 = vsel %vm420, %v456, %v455
      %v458 = vperm.slane %v403, %v422
      %v459 = vsel %vm424, %v458, %v457
      %v460 = vperm.slane %v404, %v426
      %v461 = vsel %vm428, %v460, %v459
      %v462 = vperm.slane %v405, %v430
      %v463 = vsel %vm432, %v462, %v461
      %v464 = vperm.slane %v406, %v434
      %v465 = vsel %vm436, %v464, %v463
      %v466 = vperm.slane %v407, %v438
      %v467 = vsel %vm440, %v466, %v465
      %v468 = vperm.slane %v408, %v442
      %v469 = vsel %vm444, %v468, %v467
      %vm471 = vcmask 1040384
      %v472 = vsel %vm471, %v445, %v469
      %v473 = vld [vmem:[%s1] sm:$0xff]
      %v474 = vld [vmem:[%s1 + $0x8] sm:$0xff]
      %v475 = vld [vmem:[%s1 + $0x10] sm:$0xff]
      %v476 = vld [vmem:[%s1 + $0x18] sm:$0xff]
      %v477 = vld [vmem:[%s1 + $0x20] sm:$0xff]
      %v478 = vld [vmem:[%s1 + $0x28] sm:$0xff]
      %v479 = vld [vmem:[%s1 + $0x30] sm:$0xff]
      %v480 = vld [vmem:[%s1 + $0x38] sm:$0xff]
      %v481 = vld [vmem:[%s2] sm:$0x1]
      %v483 = vperm.slane %v481, 0
      %vm485 = vcmask 523264
      %v487 = vsel %vm485, %v472, 0
      %489 = vmatpush.msra.mxu0 0.0
      %490 = vmatpush.msra.mxu0 0.0
      %491 = vmatpush.msra.mxu0 0.0
      %492 = vmatpush.msra.mxu0 0.0
      %493 = vmatpush.msra.mxu0 0.0
      %494 = vmatpush.msra.mxu0 0.0
      %495 = vmatpush.msra.mxu0 0.0
      %496 = vmatpush.msra.mxu0 0.0
      %497 = vmatpush.msra.mxu0 %v480
      %498 = vmatpush.msra.mxu0 %v479
      %499 = vmatpush.msra.mxu0 %v478
      %500 = vmatpush.msra.mxu0 %v477
      %501 = vmatpush.msra.mxu0 %v476
      %502 = vmatpush.msra.mxu0 %v475
      %503 = vmatpush.msra.mxu0 %v474
      %504 = vmatpush.msra.mxu0 %v473
      %505 = vmatmul.f32.gmra.mxu0 %v487
      %v506 = vpop.f32.mrf.mxu0
      %v507 = vadd.f32 %v483, %v506
      %508 = vdwg.mxu0
      %v509 = vmax.f32 %v507, 0.0
      %v510 = vld [vmem:[%s5] sm:$0xff]
      %v511 = vld [vmem:[%s5 + $0x8] sm:$0xff]
      %v512 = vld [vmem:[%s5 + $0x10] sm:$0xff]
      %v513 = vld [vmem:[%s5 + $0x18] sm:$0xff]
      %v514 = vld [vmem:[%s5 + $0x20] sm:$0xff]
      %v515 = vld [vmem:[%s5 + $0x28] sm:$0xff]
      %v516 = vld [vmem:[%s5 + $0x30] sm:$0xff]
      %v517 = vld [vmem:[%s5 + $0x38] sm:$0xff]
      %v518 = vld [vmem:[%s6] sm:$0x1]
      %v520 = vperm.slane %v518, 0
      %522 = vmatpush.msra.mxu0 0.0
      %523 = vmatpush.msra.mxu0 0.0
      %524 = vmatpush.msra.mxu0 0.0
      %525 = vmatpush.msra.mxu0 0.0
      %526 = vmatpush.msra.mxu0 0.0
      %527 = vmatpush.msra.mxu0 0.0
      %528 = vmatpush.msra.mxu0 0.0
      %529 = vmatpush.msra.mxu0 0.0
      %530 = vmatpush.msra.mxu0 %v517
      %531 = vmatpush.msra.mxu0 %v516
      %532 = vmatpush.msra.mxu0 %v515
      %533 = vmatpush.msra.mxu0 %v514
      %534 = vmatpush.msra.mxu0 %v513
      %535 = vmatpush.msra.mxu0 %v512
      %536 = vmatpush.msra.mxu0 %v511
      %537 = vmatpush.msra.mxu0 %v510
      %538 = vmatmul.f32.gmra.mxu0 %v487
      %v539 = vpop.f32.mrf.mxu0
      %v540 = vadd.f32 %v520, %v539
      %541 = vdwg.mxu0
      %v542 = vmax.f32 %v540, 0.0
      %v543 = vld [vmem:[%s3] sm:$0xf]
      %v544 = vld [vmem:[%s4] sm:$0x1]
      %v546 = vperm.slane %v544, 0
      %vm548 = vcmask 31744
      %v550 = vsel %vm548, %v509, 0
      %vm552 = vcmask 1043456
      %v554 = vsel %vm552, %v543, 0
      %556 = vmatpush.msra.mxu0 0.0
      %557 = vmatpush.msra.mxu0 0.0
      %558 = vmatpush.msra.mxu0 0.0
      %559 = vmatpush.msra.mxu0 0.0
      %560 = vmatpush.msra.mxu0 0.0
      %561 = vmatpush.msra.mxu0 0.0
      %562 = vmatpush.msra.mxu0 0.0
      %563 = vmatpush.msra.mxu0 0.0
      %564 = vmatpush.msra.mxu0 0.0
      %565 = vmatpush.msra.mxu0 0.0
      %566 = vmatpush.msra.mxu0 0.0
      %567 = vmatpush.msra.mxu0 0.0
      %568 = vmatpush.msra.mxu0 0.0
      %569 = vmatpush.msra.mxu0 0.0
      %570 = vmatpush.msra.mxu0 0.0
      %571 = vmatpush.msra.mxu0 %v554
      %572 = vmatmul.f32.gmra.mxu0 %v550
      %v573 = vpop.f32.mrf.mxu0
      %v574 = vadd.f32 %v546, %v573
      %575 = vdwg.mxu0
      %v576 = vxor.u32 %v574, 2147483648
      %v577 = vmul.f32 %v576, 1.442695
      %v578 = vpow.pop %v577
      %v579 = vadd.f32 %v578, 1.0
      %v580 = vrcp.pop %v579
      %v581 = vmul.f32 %v579, %v580
      %v582 = vsub.f32 1.0, %v581
      %v583 = vmul.f32 %v580, %v582
      %v584 = vadd.f32 %v580, %v583
      %vm585 = vweird.f32 %v579
      %vm586 = vweird.f32 %v580
      %vm587 = vmor %vm585, %vm586
      %v588 = vsel %vm587, %v580, %v584
      %v589 = vand.u32 2147483647, %v579
      %vm590 = vcmp.eq.f32.partialorder %v589, 8.507059e+37
      %v591 = vand.u32 %v579, 2147483648
      %v592 = vor.u32 1.1754944e-38, %v591
      %v593 = vsel %vm590, %v592, %v588
      %v594 = vmul.f32 1.0, %v593
      %v595 = vld [vmem:[%s7] sm:$0xf]
      %v596 = vld [vmem:[%s8] sm:$0x1]
      %v598 = vperm.slane %v596, 0
      %v601 = vsel %vm548, %v542, 0
      %v604 = vsel %vm552, %v595, 0
      %606 = vmatpush.msra.mxu0 0.0
      %607 = vmatpush.msra.mxu0 0.0
      %608 = vmatpush.msra.mxu0 0.0
      %609 = vmatpush.msra.mxu0 0.0
      %610 = vmatpush.msra.mxu0 0.0
      %611 = vmatpush.msra.mxu0 0.0
      %612 = vmatpush.msra.mxu0 0.0
      %613 = vmatpush.msra.mxu0 0.0
      %614 = vmatpush.msra.mxu0 0.0
      %615 = vmatpush.msra.mxu0 0.0
      %616 = vmatpush.msra.mxu0 0.0
      %617 = vmatpush.msra.mxu0 0.0
      %618 = vmatpush.msra.mxu0 0.0
      %619 = vmatpush.msra.mxu0 0.0
      %620 = vmatpush.msra.mxu0 0.0
      %621 = vmatpush.msra.mxu0 %v604
      %622 = vmatmul.f32.gmra.mxu0 %v601
      %v623 = vpop.f32.mrf.mxu0
      %v624 = vadd.f32 %v598, %v623
      %625 = vdwg.mxu0
      %v626 = vxor.u32 %v624, 2147483648
      %v627 = vmul.f32 %v626, 1.442695
      %v628 = vpow.pop %v627
      %v629 = vadd.f32 %v628, 1.0
      %v630 = vrcp.pop %v629
      %v631 = vmul.f32 %v629, %v630
      %v632 = vsub.f32 1.0, %v631
      %v633 = vmul.f32 %v630, %v632
      %v634 = vadd.f32 %v630, %v633
      %vm635 = vweird.f32 %v629
      %vm636 = vweird.f32 %v630
      %vm637 = vmor %vm635, %vm636
      %v638 = vsel %vm637, %v630, %v634
      %v639 = vand.u32 2147483647, %v629
      %vm640 = vcmp.eq.f32.partialorder %v639, 8.507059e+37
      %v641 = vand.u32 %v629, 2147483648
      %v642 = vor.u32 1.1754944e-38, %v641
      %v643 = vsel %vm640, %v642, %v638
      %v644 = vmul.f32 1.0, %v643
      %v646 = vrot.slane %v644, 1
      %v648 = vsub.f32 %v594, %v646
      %v649 = vrot.slane %v644, 7
      %v651 = vadd.f32 %v594, %v649
      %v652 = vperm.slane %v648, 0
      %v653 = vlaneseq
      %v654 = vshrl.u32 %v653, 7
      %656 = vset.pattern.permute.xlu0 %v654
      %657 = vperm.xlu0 %656, %v652
      %v658 = vpop.permute.xlu0 %657
      %v659 = vlaneseq
      %v660 = vshrl.u32 %v659, 7
      %v661 = vadd.s32 %v660, 8
      %662 = vset.pattern.permute.xlu0 %v661
      %663 = vperm.xlu0 %662, %v652
      %v664 = vpop.permute.xlu0 %663
      %v665 = vlaneseq
      %v666 = vshrl.u32 %v665, 7
      %v667 = vadd.s32 %v666, 16
      %668 = vset.pattern.permute.xlu0 %v667
      %669 = vperm.xlu0 %668, %v652
      %v670 = vpop.permute.xlu0 %669
      %v671 = vlaneseq
      %v672 = vshrl.u32 %v671, 7
      %v673 = vadd.s32 %v672, 24
      %674 = vset.pattern.permute.xlu0 %v673
      %675 = vperm.xlu0 %674, %v652
      %v676 = vpop.permute.xlu0 %675
      %v677 = vlaneseq
      %v678 = vshrl.u32 %v677, 7
      %v679 = vadd.s32 %v678, 32
      %680 = vset.pattern.permute.xlu0 %v679
      %681 = vperm.xlu0 %680, %v652
      %v682 = vpop.permute.xlu0 %681
      %v683 = vlaneseq
      %v684 = vshrl.u32 %v683, 7
      %v685 = vadd.s32 %v684, 40
      %686 = vset.pattern.permute.xlu0 %v685
      %687 = vperm.xlu0 %686, %v652
      %v688 = vpop.permute.xlu0 %687
      %v689 = vlaneseq
      %v690 = vshrl.u32 %v689, 7
      %v691 = vadd.s32 %v690, 48
      %692 = vset.pattern.permute.xlu0 %v691
      %693 = vperm.xlu0 %692, %v652
      %v694 = vpop.permute.xlu0 %693
      %v695 = vlaneseq
      %v696 = vshrl.u32 %v695, 7
      %v697 = vadd.s32 %v696, 56
      %698 = vset.pattern.permute.xlu0 %v697
      %699 = vperm.xlu0 %698, %v652
      %v700 = vpop.permute.xlu0 %699
      %v701 = vperm.slane %v651, 1
      %v702 = vlaneseq
      %v703 = vshrl.u32 %v702, 7
      %705 = vset.pattern.permute.xlu0 %v703
      %706 = vperm.xlu0 %705, %v701
      %v707 = vpop.permute.xlu0 %706
      %v708 = vlaneseq
      %v709 = vshrl.u32 %v708, 7
      %v710 = vadd.s32 %v709, 8
      %711 = vset.pattern.permute.xlu0 %v710
      %712 = vperm.xlu0 %711, %v701
      %v713 = vpop.permute.xlu0 %712
      %v714 = vlaneseq
      %v715 = vshrl.u32 %v714, 7
      %v716 = vadd.s32 %v715, 16
      %717 = vset.pattern.permute.xlu0 %v716
      %718 = vperm.xlu0 %717, %v701
      %v719 = vpop.permute.xlu0 %718
      %v720 = vlaneseq
      %v721 = vshrl.u32 %v720, 7
      %v722 = vadd.s32 %v721, 24
      %723 = vset.pattern.permute.xlu0 %v722
      %724 = vperm.xlu0 %723, %v701
      %v725 = vpop.permute.xlu0 %724
      %v726 = vlaneseq
      %v727 = vshrl.u32 %v726, 7
      %v728 = vadd.s32 %v727, 32
      %729 = vset.pattern.permute.xlu0 %v728
      %730 = vperm.xlu0 %729, %v701
      %v731 = vpop.permute.xlu0 %730
      %v732 = vlaneseq
      %v733 = vshrl.u32 %v732, 7
      %v734 = vadd.s32 %v733, 40
      %735 = vset.pattern.permute.xlu0 %v734
      %736 = vperm.xlu0 %735, %v701
      %v737 = vpop.permute.xlu0 %736
      %v738 = vlaneseq
      %v739 = vshrl.u32 %v738, 7
      %v740 = vadd.s32 %v739, 48
      %741 = vset.pattern.permute.xlu0 %v740
      %742 = vperm.xlu0 %741, %v701
      %v743 = vpop.permute.xlu0 %742
      %v744 = vlaneseq
      %v745 = vshrl.u32 %v744, 7
      %v746 = vadd.s32 %v745, 56
      %747 = vset.pattern.permute.xlu0 %v746
      %748 = vperm.xlu0 %747, %v701
      %v749 = vpop.permute.xlu0 %748
      %v750 = vsel %vm336, %v658, %v707
      %v751 = vsel %vm336, %v664, %v713
      %v752 = vsel %vm336, %v670, %v719
      %v753 = vsel %vm336, %v676, %v725
      %v754 = vsel %vm336, %v682, %v731
      %v755 = vsel %vm336, %v688, %v737
      %v756 = vsel %vm336, %v694, %v743
      %v757 = vsel %vm336, %v700, %v749
      %v758 = vmul.f32 %v337, %v750
      %v759 = vmul.f32 %v338, %v751
      %v760 = vmul.f32 %v339, %v752
      %v761 = vmul.f32 %v340, %v753
      %v762 = vmul.f32 %v341, %v754
      %v763 = vmul.f32 %v342, %v755
      %v764 = vmul.f32 %v343, %v756
      %v765 = vmul.f32 %v344, %v757
      %766 = vst [vmem:[%s332] sm:$0xff] %v758
      %767 = vst [vmem:[%s332 + $0x8] sm:$0xff] %v759
      %768 = vst [vmem:[%s332 + $0x10] sm:$0xff] %v760
      %769 = vst [vmem:[%s332 + $0x18] sm:$0xff] %v761
      %770 = vst [vmem:[%s332 + $0x20] sm:$0xff] %v762
      %771 = vst [vmem:[%s332 + $0x28] sm:$0xff] %v763
      %772 = vst [vmem:[%s332 + $0x30] sm:$0xff] %v764
      %773 = vst [vmem:[%s332 + $0x38] sm:$0xff] %v765
      %p774 = scmp.lt.s32.totalorder %s20, 1
      %s775 = scalar_select %p774, %s20, 1
      %s776 = smul.addr %s775, 8
      %s777 = smul.addr %s776, 8
      %s778 = scalar_lea.vmem %s9, %s777
      // Predicated region
      $region57: #{se_layer.1} parent=55 // pred_check
        %p779 = pneg %p232
      $region58: #{se_layer.1} parent=55 // pred_check_branch
        %781 = sbr.rel (%p779) target = $region60
      $region59: #{se_layer.1} parent=55 // pred_region
        _
      $region60: #{se_layer.1} parent=55 // pred_fallthru
        _
    $region56: #{se_layer.1} parent=5 // pred_fallthru
      _
    %p782 = scmp.le.s32.totalorder 2, %s15
    // Predicated region
    $region61: #{se_layer.1} parent=5 // pred_check
      %p783 = pneg %p782
    $region62: #{se_layer.1} parent=5 // pred_check_branch
      %785 = sbr.rel (%p783) target = $region64
    $region63: #{se_layer.1} parent=5 // pred_region
      %s786 = ssub.s32 %s15, 2
      // Predicated region
      $region65: #{se_layer.1} parent=63 // pred_check
        %p787 = pneg %p238
      $region66: #{se_layer.1} parent=63 // pred_check_branch
        %789 = sbr.rel (%p787) target = $region68
      $region67: #{se_layer.1} parent=63 // pred_region
        %p790 = scmp.lt.s32.totalorder %s21, 1
        %s791 = scalar_select %p790, %s21, 1
        %s792 = smul.addr %s791, 8
        %s793 = smul.addr %s792, 8
        %s794 = scalar_lea.vmem %s9, %s793
      $region68: #{se_layer.1} parent=63 // pred_fallthru
        _
    $region64: #{se_layer.1} parent=5 // pred_fallthru
      _
  $region6: #{se_layer.1} parent=0 // loop_footer
    %s19 = sadd.s32 1, %s15
  $region7: #{se_layer.1} parent=0 // loop_footer_branch
    %14 = sbr.rel target = $region3
  $region8: #{se_layer.1} parent=0 // loop_exit
    _

</llo_original>
